<compile_context>
chip_gen: v7x
topology: tpu7x:2x2x1
jax: 0.10.0
libtpu: 0.0.40
codegen_flags: <defaults>
</compile_context>

<pallas_src>
import jax
import jax.numpy as jnp
from jax.experimental import pallas as pl
from jax.experimental.pallas import tpu as pltpu


def _patch_embed_kernel(x_ref, w_ref, b_ref, o_ref):
    # x_ref: (tb, C, tn, P)  patch rows for tb batch items, all channels
    # w_ref: (C, P, E)       resident per-channel projection weight
    # b_ref: (1, E)          resident f32 bias
    # o_ref: (tb, tn, E)     output rows
    tb = x_ref.shape[0]
    C = x_ref.shape[1]
    bias = b_ref[...]                                   # (1, E), f32
    for b in range(tb):                                 # static unroll, tb <= 8
        # Chain of per-channel dots summed into one f32 value: partial sums
        # stay in vregs / the MXU result buffer (MRB on v7x) instead of a
        # VMEM-scratch read-modify-write per channel.
        acc = jnp.dot(x_ref[b, 0, :, :], w_ref[0, :, :],
                      preferred_element_type=jnp.float32)
        for c in range(1, C):
            acc = acc + jnp.dot(x_ref[b, c, :, :], w_ref[c, :, :],
                                preferred_element_type=jnp.float32)
        o_ref[b, :, :] = (acc + bias).astype(o_ref.dtype)


def _vmem_capacity_bytes():
    """Physical VMEM capacity (128 MiB on v5e/v6e, 64 MiB on v7x)."""
    try:
        cap = int(pltpu.get_tpu_info().vmem_capacity_bytes)
        if cap > 0:
            return cap
    except Exception:
        pass
    return 64 << 20  # conservative fallback (v7x is the smallest)


def _block_bytes(tb, tn, C, P, E, x_itemsize, out_itemsize):
    """VMEM footprint: double-buffered x/out blocks + resident weight/bias."""
    xb = tb * C * tn * P * x_itemsize
    ob = tb * tn * E * out_itemsize
    wb = C * P * E * x_itemsize
    bb = E * 4
    return 2 * (xb + ob) + wb + bb


def _pick_tiles(B, N, C, P, E, x_itemsize, out_itemsize, vmem_budget,
                target_rows=512):
    """Pick (batch_tile, row_tile).

    Row tile is a multiple of 8 (the (8,128) constraint applies to the block
    shape; partial last tiles are handled by the cdiv grid). Only falls back
    to tn == N when N < 8. The tile is shrunk until double-buffered blocks
    fit the VMEM budget, then widened across batch for small-N / large-B
    workloads so output blocks stay large and lane-dense.
    """
    if N < 8:
        tn = N                      # full-extent block is the only legal choice
    else:
        tn = min(N, target_rows)
        tn -= tn % 8
        tn = max(tn, 8)
        while tn > 8 and _block_bytes(1, tn, C, P, E,
                                      x_itemsize, out_itemsize) > vmem_budget:
            half = tn // 2
            tn = max(8, half - (half % 8))

    n_row_blocks = -(-N // tn)

    def _total_blocks(tb_):
        return (-(-B // tb_)) * n_row_blocks

    tb = 1
    # Widen across batch while tiles are small, the VMEM budget allows it,
    # and we don't collapse an existing >=2-block grid into a single block
    # (keeps something to shard across v7x's two TensorCores).
    while (tb < B and tb < 8 and tb * tn < target_rows
           and _block_bytes(tb * 2, tn, C, P, E,
                            x_itemsize, out_itemsize) <= vmem_budget
           and (_total_blocks(tb * 2) >= 2 or _total_blocks(1) < 2)):
        tb *= 2
    return min(tb, B), tn


def patch_embed_1d(x, weight, bias, patch_size, *, flatten=True,
                   compute_dtype=None, out_dtype=None,
                   batch_tile=None, row_tile=None):
    """x: (B, C, SL), weight: (E, C, P) Conv1d weight, bias: (E,).

    Returns (B, N, E) if flatten else (B, E, N), with N = SL // patch_size.
    compute_dtype: dtype fed to the MXU (None -> input dtype; accumulation is
    always f32). out_dtype: dtype of the kernel output (None -> input dtype);
    bf16 halves the dominant HBM write on this memory-bound op.
    """
    B, C, SL = x.shape
    E, Cw, P = weight.shape
    assert Cw == C and P == patch_size
    assert SL % patch_size == 0, "sample length must be a multiple of patch_size"
    N = SL // patch_size

    odt = jnp.dtype(out_dtype) if out_dtype is not None else jnp.dtype(x.dtype)
    cdt = jnp.dtype(compute_dtype) if compute_dtype is not None else jnp.dtype(x.dtype)

    # Contiguous reshape only -- no patchify transpose / no extra HBM pass on x.
    x_in = x.reshape(B, C, N, P).astype(cdt)
    # Conv weight (E, C, P) -> per-channel dense (C, P, E); tiny, one-time cost.
    w_in = jnp.transpose(weight, (1, 2, 0)).astype(cdt)
    b_in = bias.reshape(1, E).astype(jnp.float32)

    vmem_cap = _vmem_capacity_bytes()
    vmem_budget = (vmem_cap * 3) // 4           # leave headroom for internals
    tb, tn = _pick_tiles(B, N, C, P, E, cdt.itemsize, odt.itemsize, vmem_budget)
    if row_tile is not None:
        tn = row_tile
    if batch_tile is not None:
        tb = batch_tile
    assert tn == N or tn % 8 == 0, "row_tile must be a multiple of 8 or == N"

    needed = _block_bytes(tb, tn, C, P, E, cdt.itemsize, odt.itemsize)
    vmem_limit = int(min(vmem_cap - (2 << 20),
                         max(32 << 20, needed + (4 << 20))))

    grid = (pl.cdiv(B, tb), pl.cdiv(N, tn))     # both axes independent

    cost = pl.CostEstimate(
        flops=2 * B * N * C * P * E,
        transcendentals=0,
        bytes_accessed=(x_in.size * x_in.dtype.itemsize
                        + w_in.size * w_in.dtype.itemsize
                        + b_in.size * b_in.dtype.itemsize
                        + B * N * E * odt.itemsize),
    )

    out = pl.pallas_call(
        _patch_embed_kernel,
        out_shape=jax.ShapeDtypeStruct((B, N, E), odt),
        grid_spec=pltpu.PrefetchScalarGridSpec(
            num_scalar_prefetch=0,
            grid=grid,
            in_specs=[
                # x: (B, C, N, P) -> (tb, C, tn, P) block; full channel extent
                pl.BlockSpec((tb, C, tn, P), lambda bi, ni: (bi, 0, ni, 0)),
                # weight: single resident (C, P, E) block (constant index_map
                # -> fetched once, not re-DMA'd per grid step)
                pl.BlockSpec((C, P, E), lambda bi, ni: (0, 0, 0)),
                # bias: (1, E), resident
                pl.BlockSpec((1, E), lambda bi, ni: (0, 0)),
            ],
            out_specs=pl.BlockSpec((tb, tn, E), lambda bi, ni: (bi, ni, 0)),
        ),
        compiler_params=pltpu.CompilerParams(
            dimension_semantics=("parallel", "parallel"),
            vmem_limit_bytes=vmem_limit,
        ),
        cost_estimate=cost,
    )(x_in, w_in, b_in)

    if not flatten:
        # TODO(synk): if flatten=False is a hot path, emit (B, E, N) directly
        # from the kernel via a transposed out_spec instead of this XLA transpose.
        out = jnp.transpose(out, (0, 2, 1))
    # norm_layer=None -> nn.Identity(): nothing to do.
    return out


def _reference(x, weight, bias, patch_size):
    # Pure-JAX reference of Conv1d(stride=kernel_size) + transpose(1, 2).
    B, C, SL = x.shape
    E, _, P = weight.shape
    N = SL // P
    patches = x.reshape(B, C, N, P).transpose(0, 2, 1, 3).reshape(B, N, C * P)
    return patches @ weight.reshape(E, C * P).T + bias[None, None, :]


if __name__ == "__main__":
    # Small, self-consistent config: img_size = num_patches * patch_size.
    B = 2
    in_chans = 2
    patch_size = 16
    num_patches = 16
    img_size = num_patches * patch_size      # 256
    embed_dim = 128

    key = jax.random.PRNGKey(0)
    kx, kw, kb = jax.random.split(key, 3)
    x = jax.random.normal(kx, (B, in_chans, img_size), dtype=jnp.float32)
    # Deterministic synthetic parameters (Conv1d weight: (E, C, P), bias: (E,))
    weight = jax.random.normal(kw, (embed_dim, in_chans, patch_size),
                               dtype=jnp.float32) * 0.02
    bias = jax.random.normal(kb, (embed_dim,), dtype=jnp.float32) * 0.02

    ref = _reference(x, weight, bias, patch_size)

    # f32 path (defaults match the PyTorch Conv1d numerics): tight check.
    out_f32 = patch_embed_1d(x, weight, bias, patch_size)
    out_f32 = jax.block_until_ready(out_f32)
    assert out_f32.shape == (B, num_patches, embed_dim), out_f32.shape
    assert jnp.allclose(out_f32, ref, atol=1e-4, rtol=1e-4), "f32 mismatch vs reference"

    # Exercise the batch-tiled path (tb > 1, multiple row tiles), still f32.
    out_bt = patch_embed_1d(x, weight, bias, patch_size,
                            batch_tile=2, row_tile=8)
    out_bt = jax.block_until_ready(out_bt)
    assert jnp.allclose(out_bt, ref, atol=1e-4, rtol=1e-4), "batch-tiled mismatch"

    # Opt-in fast path: bf16 MXU inputs + bf16 output (f32 accumulation).
    out_bf16 = patch_embed_1d(x, weight, bias, patch_size,
                              compute_dtype=jnp.bfloat16,
                              out_dtype=jnp.bfloat16)
    out_bf16 = jax.block_until_ready(out_bf16)
    assert out_bf16.shape == (B, num_patches, embed_dim), out_bf16.shape
    assert out_bf16.dtype == jnp.bfloat16
    assert jnp.allclose(out_bf16.astype(jnp.float32), ref,
                        atol=2e-2, rtol=2e-2), "bf16 mismatch vs reference"

    # flatten=False returns (B, E, N) like the PyTorch module before transpose.
    out_nf = patch_embed_1d(x, weight, bias, patch_size, flatten=False)
    out_nf = jax.block_until_ready(out_nf)
    assert out_nf.shape == (B, embed_dim, num_patches), out_nf.shape
    assert jnp.allclose(out_nf, jnp.transpose(ref, (0, 2, 1)),
                        atol=1e-4, rtol=1e-4), "flatten=False mismatch"

    print("KERNEL_OK")
</pallas_src>

<mosaic_0001>
module attributes {stable_mosaic.version = 11 : i64} {
  func.func @_patch_embed_kernel(%arg0: i32, %arg1: i32, %arg2: memref<1x2x16x16xf32, #tpu.memory_space<vmem>>, %arg3: memref<2x16x128xf32, #tpu.memory_space<vmem>>, %arg4: memref<1x128xf32, #tpu.memory_space<vmem>>, %arg5: memref<1x16x128xf32, #tpu.memory_space<vmem>>) attributes {dimension_semantics = [#tpu.dimension_semantics<parallel>, #tpu.dimension_semantics<parallel>], iteration_bounds = array<i64: 2, 1>, scalar_prefetch = 0 : i64, scratch_operands = 0 : i64, tpu.core_type = #tpu.core_type<tc>, window_params = [{transform_indices = @transform_0, window_bounds = array<i64: 1, 2, 16, 16>}, {pipeline_mode = #tpu.pipeline_mode<synchronous>, transform_indices = @transform_1, window_bounds = array<i64: 2, 16, 128>}, {pipeline_mode = #tpu.pipeline_mode<synchronous>, transform_indices = @transform_2, window_bounds = array<i64: 1, 128>}, {transform_indices = @transform_3, window_bounds = array<i64: 1, 16, 128>}]} {
    %c0 = arith.constant 0 : index
    %c0_0 = arith.constant 0 : index
    %0 = vector.load %arg4[%c0, %c0_0] : memref<1x128xf32, #tpu.memory_space<vmem>>, vector<1x128xf32>
    %c0_1 = arith.constant 0 : index
    %c0_2 = arith.constant 0 : index
    %c0_3 = arith.constant 0 : index
    %c0_4 = arith.constant 0 : index
    %1 = vector.load %arg2[%c0_1, %c0_2, %c0_3, %c0_4] : memref<1x2x16x16xf32, #tpu.memory_space<vmem>>, vector<1x1x16x16xf32>
    %2 = vector.shape_cast %1 : vector<1x1x16x16xf32> to vector<16x16xf32>
    %c0_5 = arith.constant 0 : index
    %c0_6 = arith.constant 0 : index
    %c0_7 = arith.constant 0 : index
    %3 = vector.load %arg3[%c0_5, %c0_6, %c0_7] : memref<2x16x128xf32, #tpu.memory_space<vmem>>, vector<1x16x128xf32>
    %4 = vector.shape_cast %3 : vector<1x16x128xf32> to vector<16x128xf32>
    %cst = arith.constant dense<0.000000e+00> : vector<16x128xf32>
    %5 = tpu.matmul %2, %4, %cst {dimension_numbers = #tpu.dot_dimension_numbers<[1], [0], [0], [1], [0, 0, 1, 1], [], []>} : vector<16x16xf32>, vector<16x128xf32>, vector<16x128xf32> -> vector<16x128xf32>
    %c0_8 = arith.constant 0 : index
    %c1 = arith.constant 1 : index
    %c0_9 = arith.constant 0 : index
    %c0_10 = arith.constant 0 : index
    %6 = vector.load %arg2[%c0_8, %c1, %c0_9, %c0_10] : memref<1x2x16x16xf32, #tpu.memory_space<vmem>>, vector<1x1x16x16xf32>
    %7 = vector.shape_cast %6 : vector<1x1x16x16xf32> to vector<16x16xf32>
    %c1_11 = arith.constant 1 : index
    %c0_12 = arith.constant 0 : index
    %c0_13 = arith.constant 0 : index
    %8 = vector.load %arg3[%c1_11, %c0_12, %c0_13] : memref<2x16x128xf32, #tpu.memory_space<vmem>>, vector<1x16x128xf32>
    %9 = vector.shape_cast %8 : vector<1x16x128xf32> to vector<16x128xf32>
    %cst_14 = arith.constant dense<0.000000e+00> : vector<16x128xf32>
    %10 = tpu.matmul %7, %9, %cst_14 {dimension_numbers = #tpu.dot_dimension_numbers<[1], [0], [0], [1], [0, 0, 1, 1], [], []>} : vector<16x16xf32>, vector<16x128xf32>, vector<16x128xf32> -> vector<16x128xf32>
    %11 = arith.addf %5, %10 : vector<16x128xf32>
    %12 = vector.broadcast %0 : vector<1x128xf32> to vector<16x128xf32>
    %13 = arith.addf %11, %12 : vector<16x128xf32>
    %c0_15 = arith.constant 0 : index
    %c0_16 = arith.constant 0 : index
    %c0_17 = arith.constant 0 : index
    %14 = vector.load %arg5[%c0_15, %c0_16, %c0_17] : memref<1x16x128xf32, #tpu.memory_space<vmem>>, vector<1x16x128xf32>
    %15 = vector.shape_cast %14 : vector<1x16x128xf32> to vector<16x128xf32>
    %16 = vector.shape_cast %13 : vector<16x128xf32> to vector<1x16x128xf32>
    tpu.vector_store %arg5[%c0_15, %c0_16, %c0_17], %16 {strides = array<i32>} : memref<1x16x128xf32, #tpu.memory_space<vmem>>, vector<1x16x128xf32>,
    return
  }
  func.func @transform_0(%arg0: i32, %arg1: i32) -> (i32, i32, i32, i32) {
    %c0_i32 = arith.constant 0 : i32
    %c0_i32_0 = arith.constant 0 : i32
    %c0_i32_1 = arith.constant 0 : i32
    return %arg0, %c0_i32, %arg1, %c0_i32_0 : i32, i32, i32, i32
  }
  func.func @transform_1(%arg0: i32, %arg1: i32) -> (i32, i32, i32) {
    %c0_i32 = arith.constant 0 : i32
    %c0_i32_0 = arith.constant 0 : i32
    %c0_i32_1 = arith.constant 0 : i32
    %c0_i32_2 = arith.constant 0 : i32
    return %c0_i32, %c0_i32_0, %c0_i32_1 : i32, i32, i32
  }
  func.func @transform_2(%arg0: i32, %arg1: i32) -> (i32, i32) {
    %c0_i32 = arith.constant 0 : i32
    %c0_i32_0 = arith.constant 0 : i32
    %c0_i32_1 = arith.constant 0 : i32
    return %c0_i32, %c0_i32_0 : i32, i32
  }
  func.func @transform_3(%arg0: i32, %arg1: i32) -> (i32, i32, i32) {
    %c0_i32 = arith.constant 0 : i32
    %c0_i32_0 = arith.constant 0 : i32
    return %arg0, %arg1, %c0_i32 : i32, i32, i32
  }
}

</mosaic_0001>

<llo_original>
// kernel: tpu_custom_call.1
$region0: #{tpu_custom_call.1}
  #allocation0 [shape = 'u32[]', space=smem, size = 0x4, offset = 0x4, fixed_abs, tag = 'smem constant byte address 0x4 - core index']
  #allocation1 [shape = 'u32[144,128]{1,0:T(1,128)}', space=vmem, size = 0x12000, scoped, tag = 'internal scratch']
  %s0 = inlined_call_operand.hbm [shape: f32[2,2,16,16], index: 0, kind: input, shape index: {}]
  %s1 = inlined_call_operand.hbm [shape: f32[2,16,128], index: 1, kind: input, shape index: {}]
  %s2 = inlined_call_operand.vmem [shape: f32[1,128], index: 2, kind: input, shape index: {}]
  %s3 = inlined_call_operand.hbm [shape: f32[2,16,128], index: 3, kind: output, shape index: {}]
  %s4 = sld [smem:[#allocation0]]
  $region53: #{tpu_custom_call.1} parent=0
    _
  %s6 = ssub.s32 1, %s4
  %s7 = scalar_select 0, %s6, %s4
  $region1: #{tpu_custom_call.1} parent=0
    #allocation2 [shape = 'u8[32768]{0}', space=vmem, size = 0x8000, scoped, tag = 'input window, operand 0']
    #allocation3 [shape = 's32[2]{0}', space=sflag, size = 0x8, scoped, tag = 'scoped memory for tpu_custom_call.1']
    #allocation4 [shape = 's32[2]{0}', space=sflag, size = 0x8, scoped, tag = 'scoped memory for tpu_custom_call.1']
    #allocation5 [shape = 'u8[16384]{0}', space=vmem, size = 0x4000, scoped, tag = 'input window, operand 1, single buffered']
    #allocation6 [shape = 's32[1]{0}', space=sflag, size = 0x4, scoped, tag = 'scoped memory for tpu_custom_call.1']
    #allocation7 [shape = 'u8[16384]{0}', space=vmem, size = 0x4000, scoped, tag = 'output window, operand 0']
    %8 = vsyncpa [#allocation3], 0
    %s9 = scalar_lea.sflag [#allocation3], 1
    %10 = vsyncpa %s9, 0
    %11 = vsyncpa [#allocation6], 0
    %12 = vsyncpa [#allocation4], 0
    %s13 = scalar_lea.sflag [#allocation4], 1
    %14 = vsyncpa %s13, 0
    loop: start=0, step=1, limit=4
    $region2: #{tpu_custom_call.1} parent=1 // loop_pre_header
      _
    $region3: #{tpu_custom_call.1} parent=1 // loop_header
      %s16 = sphi 0, %s20
      %p17 = scmp.ge.s32.totalorder %s16, 4
      %s23 = sphi 0, %s35
      %s24 = sphi 0, %s31
      %s25 = sphi 0, %s23
      %s26 = sphi 0, %s24
      %s27 = sphi 0, %s25
      %s28 = sphi 0, %s26
      %s40 = sphi 0, %s42
      %s43 = sphi 0, %s40
      %s44 = sphi 0, %s43
      %s60 = sphi 0, %s44
      %s64 = sphi 0, %s64
      %s66 = sphi 0, %s64
      %s67 = sphi 0, %s66
      %s81 = sphi 0, %s67
      %s85 = sphi 0, %s85
      %s87 = sphi 0, %s85
      %s88 = sphi 0, %s87
      %s102 = sphi 0, %s88
      %s110 = sphi 0, %s112
      %s113 = sphi 0, %s110
      %s114 = sphi 0, %s113
      %s130 = sphi 0, %s114
    $region4: #{tpu_custom_call.1} parent=1 // loop_header_branch
      %19 = sbr.rel (%p17) target = $region8
    $region5: #{tpu_custom_call.1} parent=1 // loop_body
      %s21 = ssub.s32 %s16, 1
      %s22 = ssub.s32 %s16, 2
      %s29 = sadd.s32 1, %s24
      %p30 = scmp.ge.s32.totalorder %s29, 1
      %s31 = scalar_select %p30, 0, %s29
      %s32 = sadd.s32 1, %s23
      %s33 = scalar_select %p30, %s32, %s23
      %p34 = scmp.ge.s32.totalorder %s33, 2
      %s35 = scalar_select %p34, 0, %s33
      %s36 = ssub.s32 %s23, %s35
      %s37 = ssub.s32 %s24, %s31
      %s38 = sor.u32 %s36, %s37
      %p39 = scmp.eq.s32.totalorder %s38, 0
      %s41 = sadd.s32 %s40, 1
      %s42 = scalar_select %p39, %s40, %s41
      %p45 = pneg %p39
      %p46 = scmp.eq.s32.totalorder %s16, 1
      %p47 = por %p45, %p46
      %p48 = scmp.ne.s32.totalorder %s40, %s43
      %p49 = scmp.eq.s32.totalorder %s16, 0
      %p50 = por %p48, %p49
      %p51 = scmp.ne.s32.totalorder %s40, %s43
      %p52 = scmp.eq.s32.totalorder %s21, 1
      %p53 = por %p51, %p52
      %p54 = scmp.ne.s32.totalorder %s43, %s44
      %p55 = scmp.eq.s32.totalorder %s21, 0
      %p56 = por %p54, %p55
      %p57 = scmp.ne.s32.totalorder %s43, %s44
      %p58 = scmp.eq.s32.totalorder %s22, 1
      %p59 = por %p57, %p58
      %p61 = scmp.ne.s32.totalorder %s44, %s60
      %p62 = scmp.eq.s32.totalorder %s22, 0
      %p63 = por %p61, %p62
      %s65 = sadd.s32 %s64, 1
      %p68 = scmp.eq.s32.totalorder %s16, 1
      %p69 = scmp.ne.s32.totalorder %s64, %s66
      %p70 = scmp.eq.s32.totalorder %s16, 0
      %p71 = por %p69, %p70
      %p72 = scmp.ne.s32.totalorder %s64, %s66
      %p73 = scmp.eq.s32.totalorder %s21, 1
      %p74 = por %p72, %p73
      %p75 = scmp.ne.s32.totalorder %s66, %s67
      %p76 = scmp.eq.s32.totalorder %s21, 0
      %p77 = por %p75, %p76
      %p78 = scmp.ne.s32.totalorder %s66, %s67
      %p79 = scmp.eq.s32.totalorder %s22, 1
      %p80 = por %p78, %p79
      %p82 = scmp.ne.s32.totalorder %s67, %s81
      %p83 = scmp.eq.s32.totalorder %s22, 0
      %p84 = por %p82, %p83
      %s86 = sadd.s32 %s85, 1
      %p89 = scmp.eq.s32.totalorder %s16, 1
      %p90 = scmp.ne.s32.totalorder %s85, %s87
      %p91 = scmp.eq.s32.totalorder %s16, 0
      %p92 = por %p90, %p91
      %p93 = scmp.ne.s32.totalorder %s85, %s87
      %p94 = scmp.eq.s32.totalorder %s21, 1
      %p95 = por %p93, %p94
      %p96 = scmp.ne.s32.totalorder %s87, %s88
      %p97 = scmp.eq.s32.totalorder %s21, 0
      %p98 = por %p96, %p97
      %p99 = scmp.ne.s32.totalorder %s87, %s88
      %p100 = scmp.eq.s32.totalorder %s22, 1
      %p101 = por %p99, %p100
      %p103 = scmp.ne.s32.totalorder %s88, %s102
      %p104 = scmp.eq.s32.totalorder %s22, 0
      %p105 = por %p103, %p104
      %s106 = ssub.s32 %s23, %s35
      %s107 = ssub.s32 %s24, %s31
      %s108 = sor.u32 %s106, %s107
      %p109 = scmp.eq.s32.totalorder %s108, 0
      %s111 = sadd.s32 %s110, 1
      %s112 = scalar_select %p109, %s110, %s111
      %p115 = pneg %p109
      %p116 = scmp.eq.s32.totalorder %s16, 1
      %p117 = por %p115, %p116
      %p118 = scmp.ne.s32.totalorder %s110, %s113
      %p119 = scmp.eq.s32.totalorder %s16, 0
      %p120 = por %p118, %p119
      %p121 = scmp.ne.s32.totalorder %s110, %s113
      %p122 = scmp.eq.s32.totalorder %s21, 1
      %p123 = por %p121, %p122
      %p124 = scmp.ne.s32.totalorder %s113, %s114
      %p125 = scmp.eq.s32.totalorder %s21, 0
      %p126 = por %p124, %p125
      %p127 = scmp.ne.s32.totalorder %s113, %s114
      %p128 = scmp.eq.s32.totalorder %s22, 1
      %p129 = por %p127, %p128
      %p131 = scmp.ne.s32.totalorder %s114, %s130
      %p132 = scmp.eq.s32.totalorder %s22, 0
      %p133 = por %p131, %p132
      %p134 = scmp.le.s32.totalorder 1, %s16
      %p135 = scmp.lt.s32.totalorder %s16, 3
      %p136 = pnand %p134, %p135
      %p137 = pneg %p136
      // Predicated region
      $region9: #{tpu_custom_call.1} parent=5 // pred_check
        _
      $region10: #{tpu_custom_call.1} parent=5 // pred_check_branch
        %139 = sbr.rel (%p136) target = $region12
      $region11: #{tpu_custom_call.1} parent=5 // pred_region
        %s140 = ssub.s32 %s16, 1
        // Predicated region
        $region13: #{tpu_custom_call.1} parent=11 // pred_check
          %p141 = pneg %p77
        $region14: #{tpu_custom_call.1} parent=11 // pred_check_branch
          %143 = sbr.rel (%p141) target = $region16
        $region15: #{tpu_custom_call.1} parent=11 // pred_region
          %s145 = ssub.s32 512, 512
          %146 = vsyncadd [#allocation6], %s145
          %s147 = sshll.u32 [#allocation5], 4
          %s148 = int_to_ptr.vmem [resolvable:$true] %s147
          %153 = dma.hbm_to_vmem [thread:$0]  %s1, 512, %s148, [#allocation6], 128, 128, 8
        $region16: #{tpu_custom_call.1} parent=11 // pred_fallthru
          _
        // Predicated region
        $region17: #{tpu_custom_call.1} parent=11 // pred_check
          %p154 = pneg %p98
        $region18: #{tpu_custom_call.1} parent=11 // pred_check_branch
          %156 = sbr.rel (%p154) target = $region20
        $region19: #{tpu_custom_call.1} parent=11 // pred_region
          _
        $region20: #{tpu_custom_call.1} parent=11 // pred_fallthru
          _
      $region12: #{tpu_custom_call.1} parent=5 // pred_fallthru
        _
      %p157 = scmp.lt.s32.totalorder %s16, 2
      // Predicated region
      $region21: #{tpu_custom_call.1} parent=5 // pred_check
        %p158 = pneg %p157
      $region22: #{tpu_custom_call.1} parent=5 // pred_check_branch
        %160 = sbr.rel (%p158) target = $region24
      $region23: #{tpu_custom_call.1} parent=5 // pred_region
        // Predicated region
        $region25: #{tpu_custom_call.1} parent=23 // pred_check
          %p161 = pneg %p50
        $region26: #{tpu_custom_call.1} parent=23 // pred_check_branch
          %163 = sbr.rel (%p161) target = $region28
        $region27: #{tpu_custom_call.1} parent=23 // pred_region
          %s164 = sand.u32 %s40, 1
          %s165 = scalar_lea.sflag [#allocation3], %s164
          %s166 = sand.u32 %s40, 1
          %s167 = smul.addr %s166, 32
          %s168 = scalar_lea.vmem [#allocation2], %s167
          %s169 = smul.u32 2, %s24
          %s171 = ssub.s32 512, 512
          %172 = vsyncadd %s165, %s171
          %s173 = smul.addr %s23, 4
          %s174 = sadd.s32 %s169, %s173
          %s175 = smul.addr %s174, 128
          %s176 = scalar_lea.hbm %s0, %s175
          %s177 = sshll.u32 %s168, 4
          %s178 = int_to_ptr.vmem [resolvable:$true] %s177
          %183 = dma.hbm_to_vmem [thread:$0]  %s176, 512, %s178, %s165, 128, 128, 8
        $region28: #{tpu_custom_call.1} parent=23 // pred_fallthru
          _
      $region24: #{tpu_custom_call.1} parent=5 // pred_fallthru
        _
      %p184 = scmp.le.s32.totalorder 1, %s16
      %p185 = scmp.lt.s32.totalorder %s16, 3
      %p186 = pnand %p184, %p185
      %p187 = pneg %p186
      // Predicated region
      $region29: #{tpu_custom_call.1} parent=5 // pred_check
        _
      $region30: #{tpu_custom_call.1} parent=5 // pred_check_branch
        %189 = sbr.rel (%p186) target = $region32
      $region31: #{tpu_custom_call.1} parent=5 // pred_region
        %s190 = ssub.s32 %s16, 1
        %s191 = sand.u32 %s43, 1
        %s192 = scalar_lea.sflag [#allocation3], %s191
        %s193 = sand.u32 %s43, 1
        %s194 = smul.addr %s193, 32
        %s195 = scalar_lea.vmem [#allocation2], %s194
        // Predicated region
        $region33: #{tpu_custom_call.1} parent=31 // pred_check
          %p196 = pneg %p56
        $region34: #{tpu_custom_call.1} parent=31 // pred_check_branch
          %198 = sbr.rel (%p196) target = $region36
        $region35: #{tpu_custom_call.1} parent=31 // pred_region
          %199 = dma.done %s192, 512
        $region36: #{tpu_custom_call.1} parent=31 // pred_fallthru
          _
        // Predicated region
        $region37: #{tpu_custom_call.1} parent=31 // pred_check
          %p200 = pneg %p77
        $region38: #{tpu_custom_call.1} parent=31 // pred_check_branch
          %202 = sbr.rel (%p200) target = $region40
        $region39: #{tpu_custom_call.1} parent=31 // pred_region
          %203 = dma.done [#allocation6], 512
        $region40: #{tpu_custom_call.1} parent=31 // pred_fallthru
          _
        %s204 = sand.u32 %s43, 1
        %s205 = scalar_lea.sflag [#allocation3], %s204
        %s206 = sand.u32 %s43, 1
        %s207 = smul.addr %s206, 32
        %s208 = scalar_lea.vmem [#allocation2], %s207
        %p209 = pneg %p56
        %p210 = pneg %p53
        %p211 = pneg %p77
        %p212 = pneg %p74
        %p213 = pneg %p98
        %p214 = pneg %p95
        %p215 = pneg %p126
        %p216 = pneg %p123
        %s217 = sand.u32 %s113, 1
        %s218 = scalar_lea.sflag [#allocation4], %s217
        %s219 = sand.u32 %s113, 1
        %s220 = smul.addr %s219, 16
        %s221 = scalar_lea.vmem [#allocation7], %s220
        %s222 = smul.u32 2, %s26
        %s223 = smul.u32 2, %s26
        %v224 = vld [vmem:[%s2] sm:$0x1]
        %v225 = vld [vmem:[%s195] sm:$0xff]
        %v226 = vld [vmem:[%s195 + $0x8] sm:$0xff]
        %v227 = vld [vmem:[#allocation5] sm:$0xff]
        %v228 = vld [vmem:[#allocation5 + $0x8] sm:$0xff]
        %s229 = scalar_lea.vmem %s195, 16 [#allocation2]
        %v230 = vld [vmem:[%s229] sm:$0xff]
        %v231 = vld [vmem:[%s229 + $0x8] sm:$0xff]
        %s232 = scalar_lea.vmem [#allocation5], 16
        %v233 = vld [vmem:[%s232] sm:$0xff]
        %v234 = vld [vmem:[%s232 + $0x8] sm:$0xff]
        %vm235 = vcmask 130048
        %v237 = vsel %vm235, %v230, 0
        %v240 = vsel %vm235, %v231, 0
        %242 = vmatprep.subr.mxu0 0.0
        %243 = vmatpush1.msra.mxu0 %v233
        %244 = vmatprep.subr.mxu0 0.0
        %245 = vmatpush1.msra.mxu0 %v234
        %246 = vmatprep.subr.mxu0 0.0
        %247 = vmatpush1.msra.mxu0 0.0
        %248 = vmatprep.subr.mxu0 0.0
        %249 = vmatpush1.msra.mxu0 0.0
        %250 = vmatprep.subr.mxu0 0.0
        %251 = vmatpush1.msra.mxu0 0.0
        %252 = vmatprep.subr.mxu0 0.0
        %253 = vmatpush1.msra.mxu0 0.0
        %254 = vmatprep.subr.mxu0 0.0
        %255 = vmatpush1.msra.mxu0 0.0
        %256 = vmatprep.subr.mxu0 0.0
        %257 = vmatpush1.msra.mxu0 0.0
        %258 = vmatprep.subr.mxu0 0.0
        %259 = vmatpush1.msra.mxu0 0.0
        %260 = vmatprep.subr.mxu0 0.0
        %261 = vmatpush1.msra.mxu0 0.0
        %262 = vmatprep.subr.mxu0 0.0
        %263 = vmatpush1.msra.mxu0 0.0
        %264 = vmatprep.subr.mxu0 0.0
        %265 = vmatpush1.msra.mxu0 0.0
        %266 = vmatprep.subr.mxu0 0.0
        %267 = vmatpush1.msra.mxu0 0.0
        %268 = vmatprep.subr.mxu0 0.0
        %269 = vmatpush1.msra.mxu0 0.0
        %270 = vmatprep.subr.mxu0 0.0
        %271 = vmatpush1.msra.mxu0 0.0
        %272 = vmatprep.subr.mxu0 0.0
        %273 = vmatpush1.msra.mxu0 0.0
        %274 = vmatprep.subr.mxu0 0.0
        %275 = vmatpush1.msra.mxu0 0.0
        %276 = vmatprep.subr.mxu0 0.0
        %277 = vmatpush1.msra.mxu0 0.0
        %278 = vmatprep.subr.mxu0 0.0
        %279 = vmatpush1.msra.mxu0 0.0
        %280 = vmatprep.subr.mxu0 0.0
        %281 = vmatpush1.msra.mxu0 0.0
        %282 = vmatprep.subr.mxu0 0.0
        %283 = vmatpush1.msra.mxu0 0.0
        %284 = vmatprep.subr.mxu0 0.0
        %285 = vmatpush1.msra.mxu0 0.0
        %286 = vmatprep.subr.mxu0 0.0
        %287 = vmatpush1.msra.mxu0 0.0
        %288 = vmatprep.subr.mxu0 0.0
        %289 = vmatpush1.msra.mxu0 0.0
        %290 = vmatprep.subr.mxu0 0.0
        %291 = vmatpush1.msra.mxu0 0.0
        %292 = vmatprep.subr.mxu0 0.0
        %293 = vmatpush1.msra.mxu0 0.0
        %294 = vmatprep.subr.mxu0 0.0
        %295 = vmatpush1.msra.mxu0 0.0
        %296 = vmatprep.subr.mxu0 0.0
        %297 = vmatpush1.msra.mxu0 0.0
        %298 = vmatprep.subr.mxu0 0.0
        %299 = vmatpush1.msra.mxu0 0.0
        %300 = vmatprep.subr.mxu0 0.0
        %301 = vmatpush1.msra.mxu0 0.0
        %302 = vmatprep.subr.mxu0 0.0
        %303 = vmatpush1.msra.mxu0 0.0
        %304 = vmatprep.subr.mxu0 0.0
        %305 = vmatpush1.msra.mxu0 0.0
        %306 = vmatprep.mubr.f32.mxu0 0.0
        %307 = vmatmul.mubr.f32.gmra.mrb[0].mxu0 %v237
        %v308 = vpop.f32.mrb[0].mxu0
        %v309 = vadd.f32 0.0, %v308
        %v310 = vpop.f32.mrb[0].mxu0
        %311 = vmatprep.mubr.f32.mxu0 0.0
        %312 = vmatmul.mubr.f32.gmra.mrb[0].mxu0 %v240
        %v313 = vpop.f32.mrb[0].mxu0
        %v314 = vadd.f32 0.0, %v313
        %v315 = vpop.f32.mrb[0].mxu0
        %316 = vdwg.mxu0
        %v318 = vsel %vm235, %v225, 0
        %v321 = vsel %vm235, %v226, 0
        %323 = vmatprep.subr.mxu0 0.0
        %324 = vmatpush1.msra.mxu0 %v227
        %325 = vmatprep.subr.mxu0 0.0
        %326 = vmatpush1.msra.mxu0 %v228
        %327 = vmatprep.subr.mxu0 0.0
        %328 = vmatpush1.msra.mxu0 0.0
        %329 = vmatprep.subr.mxu0 0.0
        %330 = vmatpush1.msra.mxu0 0.0
        %331 = vmatprep.subr.mxu0 0.0
        %332 = vmatpush1.msra.mxu0 0.0
        %333 = vmatprep.subr.mxu0 0.0
        %334 = vmatpush1.msra.mxu0 0.0
        %335 = vmatprep.subr.mxu0 0.0
        %336 = vmatpush1.msra.mxu0 0.0
        %337 = vmatprep.subr.mxu0 0.0
        %338 = vmatpush1.msra.mxu0 0.0
        %339 = vmatprep.subr.mxu0 0.0
        %340 = vmatpush1.msra.mxu0 0.0
        %341 = vmatprep.subr.mxu0 0.0
        %342 = vmatpush1.msra.mxu0 0.0
        %343 = vmatprep.subr.mxu0 0.0
        %344 = vmatpush1.msra.mxu0 0.0
        %345 = vmatprep.subr.mxu0 0.0
        %346 = vmatpush1.msra.mxu0 0.0
        %347 = vmatprep.subr.mxu0 0.0
        %348 = vmatpush1.msra.mxu0 0.0
        %349 = vmatprep.subr.mxu0 0.0
        %350 = vmatpush1.msra.mxu0 0.0
        %351 = vmatprep.subr.mxu0 0.0
        %352 = vmatpush1.msra.mxu0 0.0
        %353 = vmatprep.subr.mxu0 0.0
        %354 = vmatpush1.msra.mxu0 0.0
        %355 = vmatprep.subr.mxu0 0.0
        %356 = vmatpush1.msra.mxu0 0.0
        %357 = vmatprep.subr.mxu0 0.0
        %358 = vmatpush1.msra.mxu0 0.0
        %359 = vmatprep.subr.mxu0 0.0
        %360 = vmatpush1.msra.mxu0 0.0
        %361 = vmatprep.subr.mxu0 0.0
        %362 = vmatpush1.msra.mxu0 0.0
        %363 = vmatprep.subr.mxu0 0.0
        %364 = vmatpush1.msra.mxu0 0.0
        %365 = vmatprep.subr.mxu0 0.0
        %366 = vmatpush1.msra.mxu0 0.0
        %367 = vmatprep.subr.mxu0 0.0
        %368 = vmatpush1.msra.mxu0 0.0
        %369 = vmatprep.subr.mxu0 0.0
        %370 = vmatpush1.msra.mxu0 0.0
        %371 = vmatprep.subr.mxu0 0.0
        %372 = vmatpush1.msra.mxu0 0.0
        %373 = vmatprep.subr.mxu0 0.0
        %374 = vmatpush1.msra.mxu0 0.0
        %375 = vmatprep.subr.mxu0 0.0
        %376 = vmatpush1.msra.mxu0 0.0
        %377 = vmatprep.subr.mxu0 0.0
        %378 = vmatpush1.msra.mxu0 0.0
        %379 = vmatprep.subr.mxu0 0.0
        %380 = vmatpush1.msra.mxu0 0.0
        %381 = vmatprep.subr.mxu0 0.0
        %382 = vmatpush1.msra.mxu0 0.0
        %383 = vmatprep.subr.mxu0 0.0
        %384 = vmatpush1.msra.mxu0 0.0
        %385 = vmatprep.subr.mxu0 0.0
        %386 = vmatpush1.msra.mxu0 0.0
        %387 = vmatprep.mubr.f32.mxu0 0.0
        %388 = vmatmul.mubr.f32.gmra.mrb[0].mxu0 %v318
        %v389 = vpop.f32.mrb[0].mxu0
        %v390 = vadd.f32 %v309, %v389
        %v391 = vpop.f32.mrb[0].mxu0
        %392 = vmatprep.mubr.f32.mxu0 0.0
        %393 = vmatmul.mubr.f32.gmra.mrb[0].mxu0 %v321
        %v394 = vpop.f32.mrb[0].mxu0
        %v395 = vadd.f32 %v314, %v394
        %v396 = vpop.f32.mrb[0].mxu0
        %397 = vdwg.mxu0
        %v399 = vlaneseq
        %v400 = vshrl.u32 %v399, 7
        %v401 = vsub.s32 0, %v400
        %v402 = vrot.slane %v224, %v401
        %v404 = vadd.f32 %v390, %v402
        %v405 = vadd.f32 %v395, %v402
        %406 = vst [vmem:[%s221] sm:$0xff] %v404
        %407 = vst [vmem:[%s221 + $0x8] sm:$0xff] %v405
        %s408 = sand.u32 %s113, 1
        %s409 = scalar_lea.sflag [#allocation4], %s408
        %s410 = sand.u32 %s113, 1
        %s411 = smul.addr %s410, 16
        %s412 = scalar_lea.vmem [#allocation7], %s411
        // Predicated region
        $region41: #{tpu_custom_call.1} parent=31 // pred_check
          %p413 = pneg %p123
        $region42: #{tpu_custom_call.1} parent=31 // pred_check_branch
          %415 = sbr.rel (%p413) target = $region44
        $region43: #{tpu_custom_call.1} parent=31 // pred_region
          %s416 = smul.u32 2, %s26
          %s418 = ssub.s32 256, 256
          %419 = vsyncadd %s409, %s418
          %s420 = smul.addr %s25, 2
          %s421 = sadd.s32 %s416, %s420
          %s422 = smul.addr %s421, 128
          %s423 = scalar_lea.hbm %s3, %s422
          %s424 = sshll.u32 %s412, 4
          %s425 = int_to_ptr.vmem [resolvable:$true] %s424
          %430 = dma.vmem_to_hbm [thread:$0]  %s425, 256, %s423, %s409, 128, 128, 8
        $region44: #{tpu_custom_call.1} parent=31 // pred_fallthru
          _
      $region32: #{tpu_custom_call.1} parent=5 // pred_fallthru
        _
      %p431 = scmp.le.s32.totalorder 2, %s16
      // Predicated region
      $region45: #{tpu_custom_call.1} parent=5 // pred_check
        %p432 = pneg %p431
      $region46: #{tpu_custom_call.1} parent=5 // pred_check_branch
        %434 = sbr.rel (%p432) target = $region48
      $region47: #{tpu_custom_call.1} parent=5 // pred_region
        %s435 = ssub.s32 %s16, 2
        // Predicated region
        $region49: #{tpu_custom_call.1} parent=47 // pred_check
          %p436 = pneg %p129
        $region50: #{tpu_custom_call.1} parent=47 // pred_check_branch
          %438 = sbr.rel (%p436) target = $region52
        $region51: #{tpu_custom_call.1} parent=47 // pred_region
          %s439 = sand.u32 %s114, 1
          %s440 = scalar_lea.sflag [#allocation4], %s439
          %s441 = sand.u32 %s114, 1
          %s442 = smul.addr %s441, 16
          %s443 = scalar_lea.vmem [#allocation7], %s442
          %444 = dma.done %s440, 256
        $region52: #{tpu_custom_call.1} parent=47 // pred_fallthru
          _
      $region48: #{tpu_custom_call.1} parent=5 // pred_fallthru
        _
    $region6: #{tpu_custom_call.1} parent=1 // loop_footer
      %s20 = sadd.s32 1, %s16
    $region7: #{tpu_custom_call.1} parent=1 // loop_footer_branch
      %15 = sbr.rel target = $region3
    $region8: #{tpu_custom_call.1} parent=1 // loop_exit
      _
    %445 = vsyncpa [#allocation3], 1
    %s446 = scalar_lea.sflag [#allocation3], 1
    %447 = vsyncpa %s446, 1
    %448 = vsyncpa [#allocation6], 1
    %449 = vsyncpa [#allocation4], 1
    %s450 = scalar_lea.sflag [#allocation4], 1
    %451 = vsyncpa %s450, 1

</llo_original>
